<compile_context>
chip_gen: v7x
topology: tpu7x:2x2x1
jax: 0.10.0
libtpu: 0.0.40
codegen_flags: <defaults>
</compile_context>

<pallas_src>
import functools

import jax
import jax.numpy as jnp
from jax import lax
from jax.experimental import pallas as pl
from jax.experimental.pallas import tpu as pltpu

LANE = 128
SUBLANE = 8


def _round_up(n, m):
    return ((n + m - 1) // m) * m


def _pad_axis(a, axis, new_size):
    pad = new_size - a.shape[axis]
    if pad == 0:
        return a
    widths = [(0, 0)] * a.ndim
    widths[axis] = (0, pad)
    return jnp.pad(a, widths)


def _sigmoid(x):
    # sigmoid(x) == 0.5 * tanh(0.5 * x) + 0.5  -> exactly one EUP push/elem.
    return 0.5 * jnp.tanh(0.5 * x) + 0.5


def _vmem_limit_bytes():
    """Generation-aware VMEM limit: ~75% of physical, safe fallback 48 MiB."""
    try:
        cap = getattr(pltpu.get_tpu_info(), "vmem_capacity_bytes", None)
        if cap:
            return int(cap) * 3 // 4          # v6e/v5e -> ~96 MiB, v7x -> ~48 MiB
    except Exception:
        pass
    return 48 * 1024 * 1024                   # below every generation's physical


def _resident_spec(block_shape, index_map):
    """Constant-index resident operand; single-buffered when supported."""
    try:
        return pl.BlockSpec(block_shape, index_map, pipeline_mode=pl.Buffered(1))
    except TypeError:                          # older API without pipeline_mode
        return pl.BlockSpec(block_shape, index_map)


# ---------------------------------------------------------------------------
# Kernels
# ---------------------------------------------------------------------------
def _lstm_step_kernel(x_ref, h_ref, c_ref, wih_ref, whh_ref, b_ref,
                      wout_ref, bout_ref, y_ref, h_out_ref, c_out_ref):
    """One LSTMCell step + output head (single module call)."""
    Rp = c_ref.shape[-1]

    gates = (jnp.dot(x_ref[...], wih_ref[...],
                     preferred_element_type=jnp.float32)
             + jnp.dot(h_ref[...], whh_ref[...],
                       preferred_element_type=jnp.float32)
             + b_ref[...])

    i_g = _sigmoid(gates[:, 0 * Rp:1 * Rp])
    f_g = _sigmoid(gates[:, 1 * Rp:2 * Rp])
    g_g = jnp.tanh(gates[:, 2 * Rp:3 * Rp])
    o_g = _sigmoid(gates[:, 3 * Rp:4 * Rp])

    c_new = f_g * c_ref[...] + i_g * g_g
    h_new = o_g * jnp.tanh(c_new)

    y = jnp.tanh(jnp.dot(h_new.astype(wout_ref.dtype), wout_ref[...],
                         preferred_element_type=jnp.float32) + bout_ref[...])

    y_ref[...] = y.astype(y_ref.dtype)
    h_out_ref[...] = h_new.astype(h_out_ref.dtype)
    c_out_ref[...] = c_new.astype(c_out_ref.dtype)


def _lstm_seq_kernel(xproj_ref, b_ref, whh_ref, h0_ref, c0_ref,
                     hseq_ref, h_ref, c_ref):
    """One grid step = one chunk of TS timesteps.

    xproj_ref : (TS, B, 4Rp) bf16 streamed  (x @ W_ih^T, bias NOT folded)
    b_ref     : (1, 4Rp)  f32  resident fused bias
    whh_ref   : (Rp, 4Rp) bf16 resident recurrent weight
    h0/c0_ref : (B, Rp)   f32  resident initial state
    hseq_ref  : (TS, B, Rp) bf16 streamed out (output head applied outside)
    h_ref/c_ref: (B, Rp) f32 constant-index OUTPUTS used as the carry
                 (written every grid step -> robust final-state writeback).
    """
    Rp = h_ref.shape[-1]
    TS = xproj_ref.shape[0]

    @pl.when(pl.program_id(0) == 0)
    def _():
        h_ref[...] = h0_ref[...]
        c_ref[...] = c0_ref[...]

    bias = b_ref[...]                                  # hoisted (1, 4Rp) f32

    def step(s, carry):
        h, c = carry
        # Only the recurrent matmul sits on the sequential critical path.
        gates = (xproj_ref[s].astype(jnp.float32) + bias
                 + jnp.dot(h.astype(whh_ref.dtype), whh_ref[...],
                           preferred_element_type=jnp.float32))

        i_g = _sigmoid(gates[:, 0 * Rp:1 * Rp])
        f_g = _sigmoid(gates[:, 1 * Rp:2 * Rp])
        g_g = jnp.tanh(gates[:, 2 * Rp:3 * Rp])
        o_g = _sigmoid(gates[:, 3 * Rp:4 * Rp])

        c_new = f_g * c + i_g * g_g
        h_new = o_g * jnp.tanh(c_new)
        hseq_ref[s] = h_new.astype(hseq_ref.dtype)
        return h_new, c_new

    h_fin, c_fin = lax.fori_loop(0, TS, step, (h_ref[...], c_ref[...]),
                                 unroll=True)
    h_ref[...] = h_fin
    c_ref[...] = c_fin


# ---------------------------------------------------------------------------
# One-time parameter preparation (transpose / fuse / pad / bf16 cast)
# ---------------------------------------------------------------------------
def prepare_params(params, mxu_dtype=jnp.bfloat16):
    w_ih = params["w_ih"]                       # (4R, in_dim)
    w_hh = params["w_hh"]                       # (4R, R)
    b_gates = params["b_ih"] + params["b_hh"]   # fused bias (4R,)
    w_out = params["w_out"]                     # (O, R)
    b_out = params["b_out"]                     # (O,)

    R = w_hh.shape[1]
    O = w_out.shape[0]
    Rp = _round_up(R, LANE)
    Op = _round_up(O, LANE)

    def pad_gate_cols(w_t):                     # (K, 4R) -> (K, 4*Rp)
        blocks = [_pad_axis(w_t[:, g * R:(g + 1) * R], 1, Rp) for g in range(4)]
        return jnp.concatenate(blocks, axis=1)

    w_ih_t = pad_gate_cols(w_ih.T)                              # (in, 4Rp)
    w_hh_t = _pad_axis(pad_gate_cols(w_hh.T), 0, Rp)            # (Rp, 4Rp)
    b_pad = jnp.concatenate(
        [_pad_axis(b_gates[g * R:(g + 1) * R], 0, Rp) for g in range(4)]
    ).reshape(1, -1)                                            # (1, 4Rp)
    w_out_t = _pad_axis(_pad_axis(w_out.T, 0, Rp), 1, Op)       # (Rp, Op)
    b_out_p = _pad_axis(b_out, 0, Op).reshape(1, -1)            # (1, Op)

    return {
        "w_ih_t": w_ih_t.astype(mxu_dtype),
        "w_hh_t": w_hh_t.astype(mxu_dtype),
        "b_gates": b_pad.astype(jnp.float32),
        "w_out_t": w_out_t.astype(mxu_dtype),
        "b_out": b_out_p.astype(jnp.float32),
    }


# ---------------------------------------------------------------------------
# Wrappers
# ---------------------------------------------------------------------------
@functools.partial(jax.jit, static_argnames=("rec_dim", "out_dim"))
def basic_lstm_forward(x, state, prep, *, rec_dim, out_dim):
    """Exact BasicLSTM.forward: x:(B,in_dim), state=(h,c):(B,rec_dim)."""
    B = x.shape[0]
    Rp = prep["w_hh_t"].shape[0]
    Op = prep["w_out_t"].shape[1]
    mxu_dtype = prep["w_hh_t"].dtype
    Bp = _round_up(B, SUBLANE)
    h0, c0 = state

    xp = _pad_axis(x.astype(jnp.float32), 0, Bp).astype(mxu_dtype)
    h0p = _pad_axis(_pad_axis(h0.astype(jnp.float32), 1, Rp), 0, Bp)
    c0p = _pad_axis(_pad_axis(c0.astype(jnp.float32), 1, Rp), 0, Bp)

    vmem = pl.BlockSpec(memory_space=pltpu.MemorySpace.VMEM)
    y, h_new, c_new = pl.pallas_call(
        _lstm_step_kernel,
        out_shape=(
            jax.ShapeDtypeStruct((Bp, Op), jnp.float32),
            jax.ShapeDtypeStruct((Bp, Rp), jnp.float32),
            jax.ShapeDtypeStruct((Bp, Rp), jnp.float32),
        ),
        in_specs=[vmem] * 8,
        out_specs=(vmem, vmem, vmem),
        compiler_params=pltpu.CompilerParams(
            vmem_limit_bytes=_vmem_limit_bytes()),
    )(xp, h0p.astype(mxu_dtype), c0p, prep["w_ih_t"], prep["w_hh_t"],
      prep["b_gates"], prep["w_out_t"], prep["b_out"])

    return y[:B, :out_dim], (h_new[:B, :rec_dim], c_new[:B, :rec_dim])


@functools.partial(jax.jit, static_argnames=("rec_dim", "out_dim", "ts_chunk"))
def basic_lstm_sequence(x_seq, state, prep, *, rec_dim, out_dim, ts_chunk=8):
    """Applies BasicLSTM.forward over x_seq:(T,B,in_dim); the whole time
    recurrence runs in ONE pallas_call with TS timesteps per grid iteration.
    Returns (y_seq:(T,B,out_dim), (h_T, c_T))."""
    T, B, in_dim = x_seq.shape
    Rp = prep["w_hh_t"].shape[0]
    Op = prep["w_out_t"].shape[1]
    mxu_dtype = prep["w_hh_t"].dtype
    Bp = _round_up(B, SUBLANE)
    # Largest chunk <= ts_chunk that divides T (static under jit).
    TS = max(ts for ts in range(1, min(ts_chunk, T) + 1) if T % ts == 0)

    h0, c0 = state
    h0p = _pad_axis(_pad_axis(h0.astype(jnp.float32), 1, Rp), 0, Bp)
    c0p = _pad_axis(_pad_axis(c0.astype(jnp.float32), 1, Rp), 0, Bp)
    x_pad = _pad_axis(x_seq.astype(jnp.float32), 1, Bp)

    # Non-recurrent input projection hoisted out of the serial loop: one big
    # MXU matmul over all T*Bp rows; streamed to the kernel as bf16 (halves
    # HBM bytes), fused bias re-added in f32 inside the kernel.
    xproj = jnp.dot(x_pad.reshape(T * Bp, in_dim).astype(mxu_dtype),
                    prep["w_ih_t"], preferred_element_type=jnp.float32
                    ).astype(mxu_dtype).reshape(T, Bp, 4 * Rp)

    flops = T * 2 * Bp * Rp * 4 * Rp
    transcendentals = T * Bp * 5 * Rp
    bytes_accessed = (xproj.size * 2 + T * Bp * Rp * 2
                      + prep["w_hh_t"].size * 2 + 4 * Rp * 4
                      + 4 * Bp * Rp * 4)

    h_seq, h_fin, c_fin = pl.pallas_call(
        _lstm_seq_kernel,
        out_shape=(
            jax.ShapeDtypeStruct((T, Bp, Rp), mxu_dtype),
            jax.ShapeDtypeStruct((Bp, Rp), jnp.float32),
            jax.ShapeDtypeStruct((Bp, Rp), jnp.float32),
        ),
        grid_spec=pltpu.PrefetchScalarGridSpec(
            num_scalar_prefetch=0,
            grid=(T // TS,),
            in_specs=[
                pl.BlockSpec((TS, Bp, 4 * Rp), lambda t: (t, 0, 0)),  # streamed
                _resident_spec((1, 4 * Rp), lambda t: (0, 0)),        # bias
                _resident_spec((Rp, 4 * Rp), lambda t: (0, 0)),       # W_hh
                _resident_spec((Bp, Rp), lambda t: (0, 0)),           # h0
                _resident_spec((Bp, Rp), lambda t: (0, 0)),           # c0
            ],
            out_specs=(
                pl.BlockSpec((TS, Bp, Rp), lambda t: (t, 0, 0)),      # h_seq
                pl.BlockSpec((Bp, Rp), lambda t: (0, 0)),             # h_T (carry)
                pl.BlockSpec((Bp, Rp), lambda t: (0, 0)),             # c_T (carry)
            ),
        ),
        compiler_params=pltpu.CompilerParams(
            dimension_semantics=("arbitrary",),
            vmem_limit_bytes=_vmem_limit_bytes(),
        ),
        cost_estimate=pl.CostEstimate(
            flops=flops, transcendentals=transcendentals,
            bytes_accessed=bytes_accessed),
    )(xproj, prep["b_gates"], prep["w_hh_t"], h0p, c0p)

    # Output head hoisted out of the recurrence: one big (T*Bp,Rp)x(Rp,Op).
    y = jnp.tanh(
        jnp.dot(h_seq.reshape(T * Bp, Rp), prep["w_out_t"],
                preferred_element_type=jnp.float32)
        + prep["b_out"]).reshape(T, Bp, Op)

    return y[:, :B, :out_dim], (h_fin[:B, :rec_dim], c_fin[:B, :rec_dim])


# ---------------------------------------------------------------------------
# Init + pure-JAX references
# ---------------------------------------------------------------------------
def init_params(key, in_dim, rec_dim, out_dim):
    ks = jax.random.split(key, 6)
    k_lstm = 1.0 / jnp.sqrt(rec_dim)
    k_lin = 1.0 / jnp.sqrt(rec_dim)
    return {
        "w_ih": jax.random.uniform(ks[0], (4 * rec_dim, in_dim),
                                   jnp.float32, -k_lstm, k_lstm),
        "w_hh": jax.random.uniform(ks[1], (4 * rec_dim, rec_dim),
                                   jnp.float32, -k_lstm, k_lstm),
        "b_ih": jax.random.uniform(ks[2], (4 * rec_dim,),
                                   jnp.float32, -k_lstm, k_lstm),
        "b_hh": jax.random.uniform(ks[3], (4 * rec_dim,),
                                   jnp.float32, -k_lstm, k_lstm),
        "w_out": jax.random.uniform(ks[4], (out_dim, rec_dim),
                                    jnp.float32, -k_lin, k_lin),
        "b_out": jax.random.uniform(ks[5], (out_dim,),
                                    jnp.float32, -k_lin, k_lin),
    }


def _reference_forward(x, state, params):
    h, c = state
    gates = (x @ params["w_ih"].T + params["b_ih"]
             + h @ params["w_hh"].T + params["b_hh"])
    R = h.shape[-1]
    i = jax.nn.sigmoid(gates[:, 0 * R:1 * R])
    f = jax.nn.sigmoid(gates[:, 1 * R:2 * R])
    g = jnp.tanh(gates[:, 2 * R:3 * R])
    o = jax.nn.sigmoid(gates[:, 3 * R:4 * R])
    c_new = f * c + i * g
    h_new = o * jnp.tanh(c_new)
    y = jnp.tanh(h_new @ params["w_out"].T + params["b_out"])
    return y, (h_new, c_new)


def _reference_sequence(x_seq, state, params):
    def step(carry, x):
        y, new_state = _reference_forward(x, carry, params)
        return new_state, y
    (hT, cT), ys = jax.lax.scan(step, state, x_seq)
    return ys, (hT, cT)


if __name__ == "__main__":
    B, in_dim, rec_dim, out_dim, T = 2, 16, 32, 16, 16

    key = jax.random.PRNGKey(0)
    k_p, k_x, k_h, k_c, k_seq = jax.random.split(key, 5)

    params = init_params(k_p, in_dim, rec_dim, out_dim)
    prep = prepare_params(params)          # one-time weight prep (bf16 MXU ops)

    # ---- single-step path: exact module semantics y,(h',c') = f(x, state) ----
    x = jax.random.normal(k_x, (B, in_dim), jnp.float32)
    h0 = jnp.zeros((B, rec_dim), jnp.float32)   # state=None -> zero state
    c0 = jnp.zeros((B, rec_dim), jnp.float32)
    y0, (h1, c1) = basic_lstm_forward(x, (h0, c0), prep,
                                      rec_dim=rec_dim, out_dim=out_dim)
    jax.block_until_ready((y0, h1, c1))

    hr = jax.random.normal(k_h, (B, rec_dim), jnp.float32)
    cr = jax.random.normal(k_c, (B, rec_dim), jnp.float32)
    y2, (h2, c2) = basic_lstm_forward(x, (hr, cr), prep,
                                      rec_dim=rec_dim, out_dim=out_dim)
    y_ref, (h_ref, c_ref) = _reference_forward(x, (hr, cr), params)
    assert jnp.allclose(y2, y_ref, atol=5e-2), "single-step y mismatch"
    assert jnp.allclose(h2, h_ref, atol=5e-2), "single-step h mismatch"
    assert jnp.allclose(c2, c_ref, atol=5e-2), "single-step c mismatch"

    # ---- sequence path: whole time recurrence inside one pallas_call ----
    x_seq = jax.random.normal(k_seq, (T, B, in_dim), jnp.float32)
    ys, (hT, cT) = basic_lstm_sequence(x_seq, (h0, c0), prep,
                                       rec_dim=rec_dim, out_dim=out_dim)
    jax.block_until_ready((ys, hT, cT))

    ys_ref, (hT_ref, cT_ref) = _reference_sequence(x_seq, (h0, c0), params)
    assert jnp.allclose(ys, ys_ref, atol=5e-2), "sequence y mismatch"
    assert jnp.allclose(hT, hT_ref, atol=5e-2), "sequence h mismatch"
    assert jnp.allclose(cT, cT_ref, atol=5e-2), "sequence c mismatch"

    print("KERNEL_OK")
</pallas_src>

<mosaic_0001>
module attributes {stable_mosaic.version = 11 : i64} {
  func.func @_lstm_step_kernel(%arg0: memref<8x16xbf16, #tpu.memory_space<vmem>>, %arg1: memref<8x128xbf16, #tpu.memory_space<vmem>>, %arg2: memref<8x128xf32, #tpu.memory_space<vmem>>, %arg3: memref<16x512xbf16, #tpu.memory_space<vmem>>, %arg4: memref<128x512xbf16, #tpu.memory_space<vmem>>, %arg5: memref<1x512xf32, #tpu.memory_space<vmem>>, %arg6: memref<128x128xbf16, #tpu.memory_space<vmem>>, %arg7: memref<1x128xf32, #tpu.memory_space<vmem>>, %arg8: memref<8x128xf32, #tpu.memory_space<vmem>>, %arg9: memref<8x128xf32, #tpu.memory_space<vmem>>, %arg10: memref<8x128xf32, #tpu.memory_space<vmem>>) attributes {dimension_semantics = [], scalar_prefetch = 0 : i64, scratch_operands = 0 : i64, tpu.core_type = #tpu.core_type<tc>} {
    %c0 = arith.constant 0 : index
    %c0_0 = arith.constant 0 : index
    %0 = vector.load %arg0[%c0, %c0_0] : memref<8x16xbf16, #tpu.memory_space<vmem>>, vector<8x16xbf16>
    %c0_1 = arith.constant 0 : index
    %c0_2 = arith.constant 0 : index
    %1 = vector.load %arg3[%c0_1, %c0_2] : memref<16x512xbf16, #tpu.memory_space<vmem>>, vector<16x512xbf16>
    %cst = arith.constant dense<0.000000e+00> : vector<8x512xf32>
    %2 = tpu.matmul %0, %1, %cst {dimension_numbers = #tpu.dot_dimension_numbers<[1], [0], [0], [1], [0, 0, 1, 1], [], []>} : vector<8x16xbf16>, vector<16x512xbf16>, vector<8x512xf32> -> vector<8x512xf32>
    %c0_3 = arith.constant 0 : index
    %c0_4 = arith.constant 0 : index
    %3 = vector.load %arg1[%c0_3, %c0_4] : memref<8x128xbf16, #tpu.memory_space<vmem>>, vector<8x128xbf16>
    %c0_5 = arith.constant 0 : index
    %c0_6 = arith.constant 0 : index
    %4 = vector.load %arg4[%c0_5, %c0_6] : memref<128x512xbf16, #tpu.memory_space<vmem>>, vector<128x512xbf16>
    %cst_7 = arith.constant dense<0.000000e+00> : vector<8x512xf32>
    %5 = tpu.matmul %3, %4, %cst_7 {dimension_numbers = #tpu.dot_dimension_numbers<[1], [0], [0], [1], [0, 0, 1, 1], [], []>} : vector<8x128xbf16>, vector<128x512xbf16>, vector<8x512xf32> -> vector<8x512xf32>
    %6 = arith.addf %2, %5 : vector<8x512xf32>
    %c0_8 = arith.constant 0 : index
    %c0_9 = arith.constant 0 : index
    %7 = vector.load %arg5[%c0_8, %c0_9] : memref<1x512xf32, #tpu.memory_space<vmem>>, vector<1x512xf32>
    %8 = vector.broadcast %7 : vector<1x512xf32> to vector<8x512xf32>
    %9 = arith.addf %6, %8 : vector<8x512xf32>
    %10 = vector.extract_strided_slice %9 {offsets = [0, 0], sizes = [8, 128], strides = [1, 1]} : vector<8x512xf32> to vector<8x128xf32>
    %cst_10 = arith.constant 5.000000e-01 : f32
    %11 = vector.broadcast %cst_10 : f32 to vector<8x128xf32>
    %12 = arith.mulf %11, %10 : vector<8x128xf32>
    %13 = math.tanh %12 : vector<8x128xf32>
    %cst_11 = arith.constant 5.000000e-01 : f32
    %14 = vector.broadcast %cst_11 : f32 to vector<8x128xf32>
    %15 = arith.mulf %14, %13 : vector<8x128xf32>
    %cst_12 = arith.constant 5.000000e-01 : f32
    %16 = vector.broadcast %cst_12 : f32 to vector<8x128xf32>
    %17 = arith.addf %15, %16 : vector<8x128xf32>
    %18 = vector.extract_strided_slice %9 {offsets = [0, 128], sizes = [8, 128], strides = [1, 1]} : vector<8x512xf32> to vector<8x128xf32>
    %cst_13 = arith.constant 5.000000e-01 : f32
    %19 = vector.broadcast %cst_13 : f32 to vector<8x128xf32>
    %20 = arith.mulf %19, %18 : vector<8x128xf32>
    %21 = math.tanh %20 : vector<8x128xf32>
    %cst_14 = arith.constant 5.000000e-01 : f32
    %22 = vector.broadcast %cst_14 : f32 to vector<8x128xf32>
    %23 = arith.mulf %22, %21 : vector<8x128xf32>
    %cst_15 = arith.constant 5.000000e-01 : f32
    %24 = vector.broadcast %cst_15 : f32 to vector<8x128xf32>
    %25 = arith.addf %23, %24 : vector<8x128xf32>
    %26 = vector.extract_strided_slice %9 {offsets = [0, 256], sizes = [8, 128], strides = [1, 1]} : vector<8x512xf32> to vector<8x128xf32>
    %27 = math.tanh %26 : vector<8x128xf32>
    %28 = vector.extract_strided_slice %9 {offsets = [0, 384], sizes = [8, 128], strides = [1, 1]} : vector<8x512xf32> to vector<8x128xf32>
    %cst_16 = arith.constant 5.000000e-01 : f32
    %29 = vector.broadcast %cst_16 : f32 to vector<8x128xf32>
    %30 = arith.mulf %29, %28 : vector<8x128xf32>
    %31 = math.tanh %30 : vector<8x128xf32>
    %cst_17 = arith.constant 5.000000e-01 : f32
    %32 = vector.broadcast %cst_17 : f32 to vector<8x128xf32>
    %33 = arith.mulf %32, %31 : vector<8x128xf32>
    %cst_18 = arith.constant 5.000000e-01 : f32
    %34 = vector.broadcast %cst_18 : f32 to vector<8x128xf32>
    %35 = arith.addf %33, %34 : vector<8x128xf32>
    %c0_19 = arith.constant 0 : index
    %c0_20 = arith.constant 0 : index
    %36 = vector.load %arg2[%c0_19, %c0_20] : memref<8x128xf32, #tpu.memory_space<vmem>>, vector<8x128xf32>
    %37 = arith.mulf %25, %36 : vector<8x128xf32>
    %38 = arith.mulf %17, %27 : vector<8x128xf32>
    %39 = arith.addf %37, %38 : vector<8x128xf32>
    %40 = math.tanh %39 : vector<8x128xf32>
    %41 = arith.mulf %35, %40 : vector<8x128xf32>
    %42 = arith.truncf %41 : vector<8x128xf32> to vector<8x128xbf16>
    %c0_21 = arith.constant 0 : index
    %c0_22 = arith.constant 0 : index
    %43 = vector.load %arg6[%c0_21, %c0_22] : memref<128x128xbf16, #tpu.memory_space<vmem>>, vector<128x128xbf16>
    %cst_23 = arith.constant dense<0.000000e+00> : vector<8x128xf32>
    %44 = tpu.matmul %42, %43, %cst_23 {dimension_numbers = #tpu.dot_dimension_numbers<[1], [0], [0], [1], [0, 0, 1, 1], [], []>} : vector<8x128xbf16>, vector<128x128xbf16>, vector<8x128xf32> -> vector<8x128xf32>
    %c0_24 = arith.constant 0 : index
    %c0_25 = arith.constant 0 : index
    %45 = vector.load %arg7[%c0_24, %c0_25] : memref<1x128xf32, #tpu.memory_space<vmem>>, vector<1x128xf32>
    %46 = vector.broadcast %45 : vector<1x128xf32> to vector<8x128xf32>
    %47 = arith.addf %44, %46 : vector<8x128xf32>
    %48 = math.tanh %47 : vector<8x128xf32>
    %c0_26 = arith.constant 0 : index
    %c0_27 = arith.constant 0 : index
    %49 = vector.load %arg8[%c0_26, %c0_27] : memref<8x128xf32, #tpu.memory_space<vmem>>, vector<8x128xf32>
    tpu.vector_store %arg8[%c0_26, %c0_27], %48 {strides = array<i32>} : memref<8x128xf32, #tpu.memory_space<vmem>>, vector<8x128xf32>,
    %c0_28 = arith.constant 0 : index
    %c0_29 = arith.constant 0 : index
    %50 = vector.load %arg9[%c0_28, %c0_29] : memref<8x128xf32, #tpu.memory_space<vmem>>, vector<8x128xf32>
    tpu.vector_store %arg9[%c0_28, %c0_29], %41 {strides = array<i32>} : memref<8x128xf32, #tpu.memory_space<vmem>>, vector<8x128xf32>,
    %c0_30 = arith.constant 0 : index
    %c0_31 = arith.constant 0 : index
    %51 = vector.load %arg10[%c0_30, %c0_31] : memref<8x128xf32, #tpu.memory_space<vmem>>, vector<8x128xf32>
    tpu.vector_store %arg10[%c0_30, %c0_31], %39 {strides = array<i32>} : memref<8x128xf32, #tpu.memory_space<vmem>>, vector<8x128xf32>,
    return
  }
}

</mosaic_0001>

<llo_original>
// kernel: basic_lstm_forward.1
$region0: #{basic_lstm_forward.1}
  #allocation0 [shape = 'u32[]', space=smem, size = 0x4, offset = 0x4, fixed_abs, tag = 'smem constant byte address 0x4 - core index']
  #allocation1 [shape = 'u32[144,128]{1,0:T(1,128)}', space=vmem, size = 0x12000, scoped, tag = 'internal scratch']
  %s0 = inlined_call_operand.vmem [shape: bf16[8,16], index: 0, kind: input, shape index: {}]
  %s1 = inlined_call_operand.vmem [shape: bf16[8,128], index: 1, kind: input, shape index: {}]
  %s2 = inlined_call_operand.vmem [shape: f32[8,128], index: 2, kind: input, shape index: {}]
  %s3 = inlined_call_operand.vmem [shape: bf16[16,512], index: 3, kind: input, shape index: {}]
  %s4 = inlined_call_operand.hbm [shape: bf16[128,512], index: 4, kind: input, shape index: {}]
  %s5 = inlined_call_operand.vmem [shape: f32[1,512], index: 5, kind: input, shape index: {}]
  %s6 = inlined_call_operand.hbm [shape: bf16[128,128], index: 6, kind: input, shape index: {}]
  %s7 = inlined_call_operand.vmem [shape: f32[1,128], index: 7, kind: input, shape index: {}]
  %s8 = inlined_call_operand.vmem [shape: f32[8,128], index: 8, kind: output, shape index: {0}]
  %s9 = inlined_call_operand.vmem [shape: f32[8,128], index: 9, kind: output, shape index: {1}]
  %s10 = inlined_call_operand.vmem [shape: f32[8,128], index: 10, kind: output, shape index: {2}]
  %11 = xla_tuple %s8, %s9, %s10
  %s12 = sld [smem:[#allocation0]]
  $region66: #{basic_lstm_forward.1} parent=0
    _
  %s14 = ssub.s32 1, %s12
  %s15 = scalar_select 0, %s14, %s12
  $region1: #{basic_lstm_forward.1} parent=0
    #allocation2 [shape = 'u8[131072]{0}', space=vmem, size = 0x20000, scoped, tag = 'input window, operand 4, single buffered']
    #allocation3 [shape = 's32[1]{0}', space=sflag, size = 0x4, scoped, tag = 'scoped memory for basic_lstm_forward.1']
    #allocation4 [shape = 'u8[32768]{0}', space=vmem, size = 0x8000, scoped, tag = 'input window, operand 6, single buffered']
    #allocation5 [shape = 's32[1]{0}', space=sflag, size = 0x4, scoped, tag = 'scoped memory for basic_lstm_forward.1']
    %16 = vsyncpa [#allocation3], 0
    %17 = vsyncpa [#allocation5], 0
    // Predicated region
    $region2: #{basic_lstm_forward.1} parent=1 // pred_check
      _
    $region3: #{basic_lstm_forward.1} parent=1 // pred_check_branch
      %19 = sbr.rel (0) target = $region5
    $region4: #{basic_lstm_forward.1} parent=1 // pred_region
      _
    $region5: #{basic_lstm_forward.1} parent=1 // pred_fallthru
      _
    // Predicated region
    $region6: #{basic_lstm_forward.1} parent=1 // pred_check
      _
    $region7: #{basic_lstm_forward.1} parent=1 // pred_check_branch
      %21 = sbr.rel (0) target = $region9
    $region8: #{basic_lstm_forward.1} parent=1 // pred_region
      _
    $region9: #{basic_lstm_forward.1} parent=1 // pred_fallthru
      _
    // Predicated region
    $region10: #{basic_lstm_forward.1} parent=1 // pred_check
      _
    $region11: #{basic_lstm_forward.1} parent=1 // pred_check_branch
      %23 = sbr.rel (0) target = $region13
    $region12: #{basic_lstm_forward.1} parent=1 // pred_region
      _
    $region13: #{basic_lstm_forward.1} parent=1 // pred_fallthru
      _
    // Predicated region
    $region14: #{basic_lstm_forward.1} parent=1 // pred_check
      _
    $region15: #{basic_lstm_forward.1} parent=1 // pred_check_branch
      %25 = sbr.rel (0) target = $region17
    $region16: #{basic_lstm_forward.1} parent=1 // pred_region
      _
    $region17: #{basic_lstm_forward.1} parent=1 // pred_fallthru
      _
    // Predicated region
    $region18: #{basic_lstm_forward.1} parent=1 // pred_check
      _
    $region19: #{basic_lstm_forward.1} parent=1 // pred_check_branch
      %27 = sbr.rel (0) target = $region21
    $region20: #{basic_lstm_forward.1} parent=1 // pred_region
      %s29 = ssub.s32 4096, 4096
      %30 = vsyncadd [#allocation3], %s29
      %s31 = sshll.u32 [#allocation2], 4
      %s32 = int_to_ptr.vmem [resolvable:$true] %s31
      %37 = dma.hbm_to_vmem [thread:$0]  %s4, 4096, %s32, [#allocation3], 256, 256, 16
    $region21: #{basic_lstm_forward.1} parent=1 // pred_fallthru
      _
    // Predicated region
    $region22: #{basic_lstm_forward.1} parent=1 // pred_check
      _
    $region23: #{basic_lstm_forward.1} parent=1 // pred_check_branch
      %39 = sbr.rel (0) target = $region25
    $region24: #{basic_lstm_forward.1} parent=1 // pred_region
      _
    $region25: #{basic_lstm_forward.1} parent=1 // pred_fallthru
      _
    // Predicated region
    $region26: #{basic_lstm_forward.1} parent=1 // pred_check
      _
    $region27: #{basic_lstm_forward.1} parent=1 // pred_check_branch
      %41 = sbr.rel (0) target = $region29
    $region28: #{basic_lstm_forward.1} parent=1 // pred_region
      %s43 = ssub.s32 1024, 1024
      %44 = vsyncadd [#allocation5], %s43
      %s45 = sshll.u32 [#allocation4], 4
      %s46 = int_to_ptr.vmem [resolvable:$true] %s45
      %51 = dma.hbm_to_vmem [thread:$0]  %s6, 1024, %s46, [#allocation5], 64, 64, 4
    $region29: #{basic_lstm_forward.1} parent=1 // pred_fallthru
      _
    // Predicated region
    $region30: #{basic_lstm_forward.1} parent=1 // pred_check
      _
    $region31: #{basic_lstm_forward.1} parent=1 // pred_check_branch
      %53 = sbr.rel (0) target = $region33
    $region32: #{basic_lstm_forward.1} parent=1 // pred_region
      _
    $region33: #{basic_lstm_forward.1} parent=1 // pred_fallthru
      _
    // Predicated region
    $region34: #{basic_lstm_forward.1} parent=1 // pred_check
      _
    $region35: #{basic_lstm_forward.1} parent=1 // pred_check_branch
      %55 = sbr.rel (0) target = $region37
    $region36: #{basic_lstm_forward.1} parent=1 // pred_region
      %56 = dma.done [#allocation3], 4096
    $region37: #{basic_lstm_forward.1} parent=1 // pred_fallthru
      _
    // Predicated region
    $region38: #{basic_lstm_forward.1} parent=1 // pred_check
      _
    $region39: #{basic_lstm_forward.1} parent=1 // pred_check_branch
      %58 = sbr.rel (0) target = $region41
    $region40: #{basic_lstm_forward.1} parent=1 // pred_region
      %59 = dma.done [#allocation5], 1024
    $region41: #{basic_lstm_forward.1} parent=1 // pred_fallthru
      _
    %v61 = vld [vmem:[%s0] sm:$0xf]
    %v62 = vld [vmem:[%s3] sm:$0xff]
    %v63 = vld [vmem:[%s3 + $0x8] sm:$0xff]
    %v64 = vld [vmem:[%s3 + $0x10] sm:$0xff]
    %v65 = vld [vmem:[%s3 + $0x18] sm:$0xff]
    %v66 = vld [vmem:[%s1] sm:$0xf]
    %v67 = vld [vmem:[#allocation2] sm:$0xff]
    %v68 = vld [vmem:[#allocation2 + $0x8] sm:$0xff]
    %v69 = vld [vmem:[#allocation2 + $0x10] sm:$0xff]
    %v70 = vld [vmem:[#allocation2 + $0x18] sm:$0xff]
    %v71 = vld [vmem:[#allocation2 + $0x20] sm:$0xff]
    %v72 = vld [vmem:[#allocation2 + $0x28] sm:$0xff]
    %v73 = vld [vmem:[#allocation2 + $0x30] sm:$0xff]
    %v74 = vld [vmem:[#allocation2 + $0x38] sm:$0xff]
    %v75 = vld [vmem:[#allocation2 + $0x40] sm:$0xff]
    %v76 = vld [vmem:[#allocation2 + $0x48] sm:$0xff]
    %v77 = vld [vmem:[#allocation2 + $0x50] sm:$0xff]
    %v78 = vld [vmem:[#allocation2 + $0x58] sm:$0xff]
    %v79 = vld [vmem:[#allocation2 + $0x60] sm:$0xff]
    %v80 = vld [vmem:[#allocation2 + $0x68] sm:$0xff]
    %v81 = vld [vmem:[#allocation2 + $0x70] sm:$0xff]
    %v82 = vld [vmem:[#allocation2 + $0x78] sm:$0xff]
    %v83 = vld [vmem:[#allocation2 + $0x80] sm:$0xff]
    %v84 = vld [vmem:[#allocation2 + $0x88] sm:$0xff]
    %v85 = vld [vmem:[#allocation2 + $0x90] sm:$0xff]
    %v86 = vld [vmem:[#allocation2 + $0x98] sm:$0xff]
    %v87 = vld [vmem:[#allocation2 + $0xa0] sm:$0xff]
    %v88 = vld [vmem:[#allocation2 + $0xa8] sm:$0xff]
    %v89 = vld [vmem:[#allocation2 + $0xb0] sm:$0xff]
    %v90 = vld [vmem:[#allocation2 + $0xb8] sm:$0xff]
    %v91 = vld [vmem:[#allocation2 + $0xc0] sm:$0xff]
    %v92 = vld [vmem:[#allocation2 + $0xc8] sm:$0xff]
    %v93 = vld [vmem:[#allocation2 + $0xd0] sm:$0xff]
    %v94 = vld [vmem:[#allocation2 + $0xd8] sm:$0xff]
    %v95 = vld [vmem:[#allocation2 + $0xe0] sm:$0xff]
    %v96 = vld [vmem:[#allocation2 + $0xe8] sm:$0xff]
    %v97 = vld [vmem:[#allocation2 + $0xf0] sm:$0xff]
    %v98 = vld [vmem:[#allocation2 + $0xf8] sm:$0xff]
    %v131 = vunpack.c.l.b16 %v67
    %v132 = vunpack.c.h.b16 %v67
    %v133 = vunpack.c.l.b16 %v68
    %v134 = vunpack.c.h.b16 %v68
    %v135 = vunpack.c.l.b16 %v69
    %v136 = vunpack.c.h.b16 %v69
    %v137 = vunpack.c.l.b16 %v70
    %v138 = vunpack.c.h.b16 %v70
    %v139 = vunpack.c.l.b16 %v71
    %v140 = vunpack.c.h.b16 %v71
    %v141 = vunpack.c.l.b16 %v72
    %v142 = vunpack.c.h.b16 %v72
    %v143 = vunpack.c.l.b16 %v73
    %v144 = vunpack.c.h.b16 %v73
    %v145 = vunpack.c.l.b16 %v74
    %v146 = vunpack.c.h.b16 %v74
    %v147 = vunpack.c.l.b16 %v75
    %v148 = vunpack.c.h.b16 %v75
    %v149 = vunpack.c.l.b16 %v76
    %v150 = vunpack.c.h.b16 %v76
    %v151 = vunpack.c.l.b16 %v77
    %v152 = vunpack.c.h.b16 %v77
    %v153 = vunpack.c.l.b16 %v78
    %v154 = vunpack.c.h.b16 %v78
    %v155 = vunpack.c.l.b16 %v79
    %v156 = vunpack.c.h.b16 %v79
    %v157 = vunpack.c.l.b16 %v80
    %v158 = vunpack.c.h.b16 %v80
    %v159 = vunpack.c.l.b16 %v81
    %v160 = vunpack.c.h.b16 %v81
    %v161 = vunpack.c.l.b16 %v82
    %v162 = vunpack.c.h.b16 %v82
    %v163 = vunpack.c.l.b16 %v83
    %v164 = vunpack.c.h.b16 %v83
    %v165 = vunpack.c.l.b16 %v84
    %v166 = vunpack.c.h.b16 %v84
    %v167 = vunpack.c.l.b16 %v85
    %v168 = vunpack.c.h.b16 %v85
    %v169 = vunpack.c.l.b16 %v86
    %v170 = vunpack.c.h.b16 %v86
    %v171 = vunpack.c.l.b16 %v87
    %v172 = vunpack.c.h.b16 %v87
    %v173 = vunpack.c.l.b16 %v88
    %v174 = vunpack.c.h.b16 %v88
    %v175 = vunpack.c.l.b16 %v89
    %v176 = vunpack.c.h.b16 %v89
    %v177 = vunpack.c.l.b16 %v90
    %v178 = vunpack.c.h.b16 %v90
    %v179 = vunpack.c.l.b16 %v91
    %v180 = vunpack.c.h.b16 %v91
    %v181 = vunpack.c.l.b16 %v92
    %v182 = vunpack.c.h.b16 %v92
    %v183 = vunpack.c.l.b16 %v93
    %v184 = vunpack.c.h.b16 %v93
    %v185 = vunpack.c.l.b16 %v94
    %v186 = vunpack.c.h.b16 %v94
    %v187 = vunpack.c.l.b16 %v95
    %v188 = vunpack.c.h.b16 %v95
    %v189 = vunpack.c.l.b16 %v96
    %v190 = vunpack.c.h.b16 %v96
    %v191 = vunpack.c.l.b16 %v97
    %v192 = vunpack.c.h.b16 %v97
    %v193 = vunpack.c.l.b16 %v98
    %v194 = vunpack.c.h.b16 %v98
    %v195 = vpack.c.b16 %v135, %v131
    %v196 = vpack.c.b16 %v136, %v132
    %v197 = vpack.c.b16 %v137, %v133
    %v198 = vpack.c.b16 %v138, %v134
    %v199 = vpack.c.b16 %v143, %v139
    %v200 = vpack.c.b16 %v144, %v140
    %v201 = vpack.c.b16 %v145, %v141
    %v202 = vpack.c.b16 %v146, %v142
    %v203 = vpack.c.b16 %v151, %v147
    %v204 = vpack.c.b16 %v152, %v148
    %v205 = vpack.c.b16 %v153, %v149
    %v206 = vpack.c.b16 %v154, %v150
    %v207 = vpack.c.b16 %v159, %v155
    %v208 = vpack.c.b16 %v160, %v156
    %v209 = vpack.c.b16 %v161, %v157
    %v210 = vpack.c.b16 %v162, %v158
    %v211 = vpack.c.b16 %v167, %v163
    %v212 = vpack.c.b16 %v168, %v164
    %v213 = vpack.c.b16 %v169, %v165
    %v214 = vpack.c.b16 %v170, %v166
    %v215 = vpack.c.b16 %v175, %v171
    %v216 = vpack.c.b16 %v176, %v172
    %v217 = vpack.c.b16 %v177, %v173
    %v218 = vpack.c.b16 %v178, %v174
    %v219 = vpack.c.b16 %v183, %v179
    %v220 = vpack.c.b16 %v184, %v180
    %v221 = vpack.c.b16 %v185, %v181
    %v222 = vpack.c.b16 %v186, %v182
    %v223 = vpack.c.b16 %v191, %v187
    %v224 = vpack.c.b16 %v192, %v188
    %v225 = vpack.c.b16 %v193, %v189
    %v226 = vpack.c.b16 %v194, %v190
    %259 = vmatprep.subr.bf16.mxu0 %v196
    %260 = vmatpush1.bf16.msra.mxu0 %v195
    %261 = vmatprep.subr.bf16.mxu0 %v200
    %262 = vmatpush1.bf16.msra.mxu0 %v199
    %263 = vmatprep.subr.bf16.mxu0 %v204
    %264 = vmatpush1.bf16.msra.mxu0 %v203
    %265 = vmatprep.subr.bf16.mxu0 %v208
    %266 = vmatpush1.bf16.msra.mxu0 %v207
    %267 = vmatprep.subr.bf16.mxu0 %v212
    %268 = vmatpush1.bf16.msra.mxu0 %v211
    %269 = vmatprep.subr.bf16.mxu0 %v216
    %270 = vmatpush1.bf16.msra.mxu0 %v215
    %271 = vmatprep.subr.bf16.mxu0 %v220
    %272 = vmatpush1.bf16.msra.mxu0 %v219
    %273 = vmatprep.subr.bf16.mxu0 %v224
    %274 = vmatpush1.bf16.msra.mxu0 %v223
    %275 = vmatprep.subr.bf16.mxu0 0
    %276 = vmatpush1.bf16.msra.mxu0 0
    %277 = vmatprep.subr.bf16.mxu0 0
    %278 = vmatpush1.bf16.msra.mxu0 0
    %279 = vmatprep.subr.bf16.mxu0 0
    %280 = vmatpush1.bf16.msra.mxu0 0
    %281 = vmatprep.subr.bf16.mxu0 0
    %282 = vmatpush1.bf16.msra.mxu0 0
    %283 = vmatprep.subr.bf16.mxu0 0
    %284 = vmatpush1.bf16.msra.mxu0 0
    %285 = vmatprep.subr.bf16.mxu0 0
    %286 = vmatpush1.bf16.msra.mxu0 0
    %287 = vmatprep.subr.bf16.mxu0 0
    %288 = vmatpush1.bf16.msra.mxu0 0
    %289 = vmatprep.subr.bf16.mxu0 0
    %290 = vmatpush1.bf16.msra.mxu0 0
    %291 = vmatprep.mubr.bf16.mxu0 0
    %292 = vmatmul.mubr.bf16.gmra.mrb[0].mxu0 %v66
    %v293 = vpop.f32.mrb[0].mxu0
    %v294 = vadd.f32 0.0, %v293
    %v295 = vpop.f32.mrb[0].mxu0
    %v296 = vadd.f32 0.0, %v295
    %v297 = vpop.f32.mrb[0].mxu0
    %v298 = vpop.f32.mrb[0].mxu0
    %299 = vdwg.mxu0
    %300 = vmatprep.subr.bf16.mxu0 %v198
    %301 = vmatpush1.bf16.msra.mxu0 %v197
    %302 = vmatprep.subr.bf16.mxu0 %v202
    %303 = vmatpush1.bf16.msra.mxu0 %v201
    %304 = vmatprep.subr.bf16.mxu0 %v206
    %305 = vmatpush1.bf16.msra.mxu0 %v205
    %306 = vmatprep.subr.bf16.mxu0 %v210
    %307 = vmatpush1.bf16.msra.mxu0 %v209
    %308 = vmatprep.subr.bf16.mxu0 %v214
    %309 = vmatpush1.bf16.msra.mxu0 %v213
    %310 = vmatprep.subr.bf16.mxu0 %v218
    %311 = vmatpush1.bf16.msra.mxu0 %v217
    %312 = vmatprep.subr.bf16.mxu0 %v222
    %313 = vmatpush1.bf16.msra.mxu0 %v221
    %314 = vmatprep.subr.bf16.mxu0 %v226
    %315 = vmatpush1.bf16.msra.mxu0 %v225
    %316 = vmatprep.subr.bf16.mxu0 0
    %317 = vmatpush1.bf16.msra.mxu0 0
    %318 = vmatprep.subr.bf16.mxu0 0
    %319 = vmatpush1.bf16.msra.mxu0 0
    %320 = vmatprep.subr.bf16.mxu0 0
    %321 = vmatpush1.bf16.msra.mxu0 0
    %322 = vmatprep.subr.bf16.mxu0 0
    %323 = vmatpush1.bf16.msra.mxu0 0
    %324 = vmatprep.subr.bf16.mxu0 0
    %325 = vmatpush1.bf16.msra.mxu0 0
    %326 = vmatprep.subr.bf16.mxu0 0
    %327 = vmatpush1.bf16.msra.mxu0 0
    %328 = vmatprep.subr.bf16.mxu0 0
    %329 = vmatpush1.bf16.msra.mxu0 0
    %330 = vmatprep.subr.bf16.mxu0 0
    %331 = vmatpush1.bf16.msra.mxu0 0
    %332 = vmatprep.mubr.bf16.mxu0 0
    %333 = vmatmul.mubr.bf16.gmra.mrb[0].mxu0 %v66
    %v334 = vpop.f32.mrb[0].mxu0
    %v335 = vadd.f32 0.0, %v334
    %v336 = vpop.f32.mrb[0].mxu0
    %v337 = vadd.f32 0.0, %v336
    %v338 = vpop.f32.mrb[0].mxu0
    %v339 = vpop.f32.mrb[0].mxu0
    %340 = vdwg.mxu0
    %v345 = vunpack.c.l.b16 %v62
    %v346 = vunpack.c.h.b16 %v62
    %v347 = vunpack.c.l.b16 %v63
    %v348 = vunpack.c.h.b16 %v63
    %v349 = vunpack.c.l.b16 %v64
    %v350 = vunpack.c.h.b16 %v64
    %v351 = vunpack.c.l.b16 %v65
    %v352 = vunpack.c.h.b16 %v65
    %v353 = vpack.c.b16 %v349, %v345
    %v354 = vpack.c.b16 %v350, %v346
    %v355 = vpack.c.b16 %v351, %v347
    %v356 = vpack.c.b16 %v352, %v348
    %vm361 = vcmask 130048
    %v363 = vsel %vm361, %v61, 0
    %365 = vmatprep.subr.bf16.mxu0 %v354
    %366 = vmatpush1.bf16.msra.mxu0 %v353
    %367 = vmatprep.subr.bf16.mxu0 0
    %368 = vmatpush1.bf16.msra.mxu0 0
    %369 = vmatprep.subr.bf16.mxu0 0
    %370 = vmatpush1.bf16.msra.mxu0 0
    %371 = vmatprep.subr.bf16.mxu0 0
    %372 = vmatpush1.bf16.msra.mxu0 0
    %373 = vmatprep.subr.bf16.mxu0 0
    %374 = vmatpush1.bf16.msra.mxu0 0
    %375 = vmatprep.subr.bf16.mxu0 0
    %376 = vmatpush1.bf16.msra.mxu0 0
    %377 = vmatprep.subr.bf16.mxu0 0
    %378 = vmatpush1.bf16.msra.mxu0 0
    %379 = vmatprep.subr.bf16.mxu0 0
    %380 = vmatpush1.bf16.msra.mxu0 0
    %381 = vmatprep.subr.bf16.mxu0 0
    %382 = vmatpush1.bf16.msra.mxu0 0
    %383 = vmatprep.subr.bf16.mxu0 0
    %384 = vmatpush1.bf16.msra.mxu0 0
    %385 = vmatprep.subr.bf16.mxu0 0
    %386 = vmatpush1.bf16.msra.mxu0 0
    %387 = vmatprep.subr.bf16.mxu0 0
    %388 = vmatpush1.bf16.msra.mxu0 0
    %389 = vmatprep.subr.bf16.mxu0 0
    %390 = vmatpush1.bf16.msra.mxu0 0
    %391 = vmatprep.subr.bf16.mxu0 0
    %392 = vmatpush1.bf16.msra.mxu0 0
    %393 = vmatprep.subr.bf16.mxu0 0
    %394 = vmatpush1.bf16.msra.mxu0 0
    %395 = vmatprep.subr.bf16.mxu0 0
    %396 = vmatpush1.bf16.msra.mxu0 0
    %397 = vmatprep.mubr.bf16.mxu0 0
    %398 = vmatmul.mubr.bf16.gmra.mrb[0].mxu0 %v363
    %v399 = vpop.f32.mrb[0].mxu0
    %v400 = vadd.f32 %v294, %v399
    %v401 = vpop.f32.mrb[0].mxu0
    %v402 = vadd.f32 %v296, %v401
    %v403 = vpop.f32.mrb[0].mxu0
    %v404 = vpop.f32.mrb[0].mxu0
    %405 = vdwg.mxu0
    %406 = vmatprep.subr.bf16.mxu0 %v356
    %407 = vmatpush1.bf16.msra.mxu0 %v355
    %408 = vmatprep.subr.bf16.mxu0 0
    %409 = vmatpush1.bf16.msra.mxu0 0
    %410 = vmatprep.subr.bf16.mxu0 0
    %411 = vmatpush1.bf16.msra.mxu0 0
    %412 = vmatprep.subr.bf16.mxu0 0
    %413 = vmatpush1.bf16.msra.mxu0 0
    %414 = vmatprep.subr.bf16.mxu0 0
    %415 = vmatpush1.bf16.msra.mxu0 0
    %416 = vmatprep.subr.bf16.mxu0 0
    %417 = vmatpush1.bf16.msra.mxu0 0
    %418 = vmatprep.subr.bf16.mxu0 0
    %419 = vmatpush1.bf16.msra.mxu0 0
    %420 = vmatprep.subr.bf16.mxu0 0
    %421 = vmatpush1.bf16.msra.mxu0 0
    %422 = vmatprep.subr.bf16.mxu0 0
    %423 = vmatpush1.bf16.msra.mxu0 0
    %424 = vmatprep.subr.bf16.mxu0 0
    %425 = vmatpush1.bf16.msra.mxu0 0
    %426 = vmatprep.subr.bf16.mxu0 0
    %427 = vmatpush1.bf16.msra.mxu0 0
    %428 = vmatprep.subr.bf16.mxu0 0
    %429 = vmatpush1.bf16.msra.mxu0 0
    %430 = vmatprep.subr.bf16.mxu0 0
    %431 = vmatpush1.bf16.msra.mxu0 0
    %432 = vmatprep.subr.bf16.mxu0 0
    %433 = vmatpush1.bf16.msra.mxu0 0
    %434 = vmatprep.subr.bf16.mxu0 0
    %435 = vmatpush1.bf16.msra.mxu0 0
    %436 = vmatprep.subr.bf16.mxu0 0
    %437 = vmatpush1.bf16.msra.mxu0 0
    %438 = vmatprep.mubr.bf16.mxu0 0
    %439 = vmatmul.mubr.bf16.gmra.mrb[0].mxu0 %v363
    %v440 = vpop.f32.mrb[0].mxu0
    %v441 = vadd.f32 %v335, %v440
    %v442 = vpop.f32.mrb[0].mxu0
    %v443 = vadd.f32 %v337, %v442
    %v444 = vpop.f32.mrb[0].mxu0
    %v445 = vpop.f32.mrb[0].mxu0
    %446 = vdwg.mxu0
    %v447 = vld [vmem:[%s5] sm:$0xf]
    %v449 = vlaneseq
    %v450 = vshrl.u32 %v449, 7
    %v451 = vsub.s32 0, %v450
    %v452 = vrot.slane %v447, %v451
    %v453 = vlaneseq
    %v454 = vshrl.u32 %v453, 7
    %v455 = vsub.s32 1, %v454
    %v456 = vrot.slane %v447, %v455
    %v457 = vlaneseq
    %v458 = vshrl.u32 %v457, 7
    %v459 = vsub.s32 2, %v458
    %v460 = vrot.slane %v447, %v459
    %v461 = vlaneseq
    %v462 = vshrl.u32 %v461, 7
    %v463 = vsub.s32 3, %v462
    %v464 = vrot.slane %v447, %v463
    %v469 = vadd.f32 %v400, %v452
    %v470 = vadd.f32 %v402, %v456
    %v471 = vadd.f32 %v441, %v460
    %v472 = vadd.f32 %v443, %v464
    %v473 = vmul.f32 %v469, 0.5
    %v474 = vtanh.pop %v473
    %v475 = vmul.f32 %v474, 0.5
    %v476 = vadd.f32 %v475, 0.5
    %v477 = vmul.f32 %v470, 0.5
    %v478 = vtanh.pop %v477
    %v479 = vmul.f32 %v478, 0.5
    %v480 = vadd.f32 %v479, 0.5
    %v481 = vtanh.pop %v471
    %v482 = vmul.f32 %v472, 0.5
    %v483 = vtanh.pop %v482
    %v484 = vmul.f32 %v483, 0.5
    %v485 = vadd.f32 %v484, 0.5
    %v486 = vld [vmem:[%s2] sm:$0xff]
    %v487 = vmul.f32 %v480, %v486
    %v488 = vmul.f32 %v476, %v481
    %v489 = vadd.f32 %v487, %v488
    %v490 = vtanh.pop %v489
    %v491 = vmul.f32 %v485, %v490
    %v492 = vpack.c.bf16 %v491, %v491
    %v493 = vld [vmem:[#allocation4] sm:$0xf]
    %v494 = vld [vmem:[#allocation4 + $0x4] sm:$0xf]
    %v495 = vld [vmem:[#allocation4 + $0x8] sm:$0xf]
    %v496 = vld [vmem:[#allocation4 + $0xc] sm:$0xf]
    %v497 = vld [vmem:[#allocation4 + $0x10] sm:$0xf]
    %v498 = vld [vmem:[#allocation4 + $0x14] sm:$0xf]
    %v499 = vld [vmem:[#allocation4 + $0x18] sm:$0xf]
    %v500 = vld [vmem:[#allocation4 + $0x1c] sm:$0xf]
    %v501 = vld [vmem:[#allocation4 + $0x20] sm:$0xf]
    %v502 = vld [vmem:[#allocation4 + $0x24] sm:$0xf]
    %v503 = vld [vmem:[#allocation4 + $0x28] sm:$0xf]
    %v504 = vld [vmem:[#allocation4 + $0x2c] sm:$0xf]
    %v505 = vld [vmem:[#allocation4 + $0x30] sm:$0xf]
    %v506 = vld [vmem:[#allocation4 + $0x34] sm:$0xf]
    %v507 = vld [vmem:[#allocation4 + $0x38] sm:$0xf]
    %v508 = vld [vmem:[#allocation4 + $0x3c] sm:$0xf]
    %v509 = vld [vmem:[%s7] sm:$0x1]
    %v511 = vlaneseq
    %v512 = vshrl.u32 %v511, 7
    %v513 = vsub.s32 0, %v512
    %v514 = vrot.slane %v509, %v513
    %v532 = vunpack.c.l.b16 %v493
    %v533 = vunpack.c.l.b16 %v494
    %v534 = vunpack.c.l.b16 %v495
    %v535 = vunpack.c.l.b16 %v496
    %v536 = vunpack.c.l.b16 %v497
    %v537 = vunpack.c.l.b16 %v498
    %v538 = vunpack.c.l.b16 %v499
    %v539 = vunpack.c.l.b16 %v500
    %v540 = vunpack.c.l.b16 %v501
    %v541 = vunpack.c.l.b16 %v502
    %v542 = vunpack.c.l.b16 %v503
    %v543 = vunpack.c.l.b16 %v504
    %v544 = vunpack.c.l.b16 %v505
    %v545 = vunpack.c.l.b16 %v506
    %v546 = vunpack.c.l.b16 %v507
    %v547 = vunpack.c.l.b16 %v508
    %v548 = vpack.c.b16 %v533, %v532
    %v549 = vpack.c.b16 %v535, %v534
    %v550 = vpack.c.b16 %v537, %v536
    %v551 = vpack.c.b16 %v539, %v538
    %v552 = vpack.c.b16 %v541, %v540
    %v553 = vpack.c.b16 %v543, %v542
    %v554 = vpack.c.b16 %v545, %v544
    %v555 = vpack.c.b16 %v547, %v546
    %564 = vmatprep.subr.bf16.mxu0 0
    %565 = vmatpush1.bf16.msra.mxu0 %v548
    %566 = vmatprep.subr.bf16.mxu0 0
    %567 = vmatpush1.bf16.msra.mxu0 %v549
    %568 = vmatprep.subr.bf16.mxu0 0
    %569 = vmatpush1.bf16.msra.mxu0 %v550
    %570 = vmatprep.subr.bf16.mxu0 0
    %571 = vmatpush1.bf16.msra.mxu0 %v551
    %572 = vmatprep.subr.bf16.mxu0 0
    %573 = vmatpush1.bf16.msra.mxu0 %v552
    %574 = vmatprep.subr.bf16.mxu0 0
    %575 = vmatpush1.bf16.msra.mxu0 %v553
    %576 = vmatprep.subr.bf16.mxu0 0
    %577 = vmatpush1.bf16.msra.mxu0 %v554
    %578 = vmatprep.subr.bf16.mxu0 0
    %579 = vmatpush1.bf16.msra.mxu0 %v555
    %580 = vmatprep.subr.bf16.mxu0 0
    %581 = vmatpush1.bf16.msra.mxu0 0
    %582 = vmatprep.subr.bf16.mxu0 0
    %583 = vmatpush1.bf16.msra.mxu0 0
    %584 = vmatprep.subr.bf16.mxu0 0
    %585 = vmatpush1.bf16.msra.mxu0 0
    %586 = vmatprep.subr.bf16.mxu0 0
    %587 = vmatpush1.bf16.msra.mxu0 0
    %588 = vmatprep.subr.bf16.mxu0 0
    %589 = vmatpush1.bf16.msra.mxu0 0
    %590 = vmatprep.subr.bf16.mxu0 0
    %591 = vmatpush1.bf16.msra.mxu0 0
    %592 = vmatprep.subr.bf16.mxu0 0
    %593 = vmatpush1.bf16.msra.mxu0 0
    %594 = vmatprep.subr.bf16.mxu0 0
    %595 = vmatpush1.bf16.msra.mxu0 0
    %596 = vmatprep.mubr.bf16.mxu0 0
    %597 = vmatmul.mubr.bf16.gmra.mrb[0].mxu0 %v492
    %v598 = vpop.f32.mrb[0].mxu0
    %v599 = vadd.f32 %v514, %v598
    %v600 = vpop.f32.mrb[0].mxu0
    %v601 = vpop.f32.mrb[0].mxu0
    %v602 = vpop.f32.mrb[0].mxu0
    %603 = vdwg.mxu0
    %v604 = vtanh.pop %v599
    %605 = vst [vmem:[%s8] sm:$0xff] %v604
    %606 = vst [vmem:[%s9] sm:$0xff] %v491
    %607 = vst [vmem:[%s10] sm:$0xff] %v489
    // Predicated region
    $region42: #{basic_lstm_forward.1} parent=1 // pred_check
      _
    $region43: #{basic_lstm_forward.1} parent=1 // pred_check_branch
      %609 = sbr.rel (0) target = $region45
    $region44: #{basic_lstm_forward.1} parent=1 // pred_region
      _
    $region45: #{basic_lstm_forward.1} parent=1 // pred_fallthru
      _
    // Predicated region
    $region46: #{basic_lstm_forward.1} parent=1 // pred_check
      _
    $region47: #{basic_lstm_forward.1} parent=1 // pred_check_branch
      %611 = sbr.rel (0) target = $region49
    $region48: #{basic_lstm_forward.1} parent=1 // pred_region
      _
    $region49: #{basic_lstm_forward.1} parent=1 // pred_fallthru
      _
    // Predicated region
    $region50: #{basic_lstm_forward.1} parent=1 // pred_check
      _
    $region51: #{basic_lstm_forward.1} parent=1 // pred_check_branch
      %613 = sbr.rel (0) target = $region53
    $region52: #{basic_lstm_forward.1} parent=1 // pred_region
      _
    $region53: #{basic_lstm_forward.1} parent=1 // pred_fallthru
      _
    // Predicated region
    $region54: #{basic_lstm_forward.1} parent=1 // pred_check
      _
    $region55: #{basic_lstm_forward.1} parent=1 // pred_check_branch
      %615 = sbr.rel (0) target = $region57
    $region56: #{basic_lstm_forward.1} parent=1 // pred_region
      _
    $region57: #{basic_lstm_forward.1} parent=1 // pred_fallthru
      _
    // Predicated region
    $region58: #{basic_lstm_forward.1} parent=1 // pred_check
      _
    $region59: #{basic_lstm_forward.1} parent=1 // pred_check_branch
      %617 = sbr.rel (0) target = $region61
    $region60: #{basic_lstm_forward.1} parent=1 // pred_region
      _
    $region61: #{basic_lstm_forward.1} parent=1 // pred_fallthru
      _
    // Predicated region
    $region62: #{basic_lstm_forward.1} parent=1 // pred_check
      _
    $region63: #{basic_lstm_forward.1} parent=1 // pred_check_branch
      %619 = sbr.rel (0) target = $region65
    $region64: #{basic_lstm_forward.1} parent=1 // pred_region
      _
    $region65: #{basic_lstm_forward.1} parent=1 // pred_fallthru
      _
    %620 = vsyncpa [#allocation3], 1
    %621 = vsyncpa [#allocation5], 1

</llo_original>
